<compile_context>
chip_gen: v5e
topology: v5e:2x2
jax: 0.10.0
libtpu: 0.0.40
codegen_flags: <defaults>
</compile_context>

<pallas_src>
import functools
import math

import jax
import jax.numpy as jnp
from jax import lax
from jax.experimental import pallas as pl
from jax.experimental.pallas import tpu as pltpu

_EPS = 1e-12  # torch.nn.functional.normalize default eps


def _round_up(x, m):
    return (x + m - 1) // m * m


def _vmem_budget(double_buffered_bytes):
    # headroom for kernel temporaries, clamped so it stays inside v7x's 64 MiB VMEM.
    est = int(1.5 * double_buffered_bytes) + (8 << 20)
    return int(min(max(est, 16 << 20), 48 << 20))


def _normalize_rows_kernel(x_ref, o_ref, *, scaling):
    """Prologue: scaling * L2-normalize each row, cast to the MXU compute dtype."""
    x = x_ref[...].astype(jnp.float32)
    inv = lax.rsqrt(jnp.maximum(jnp.sum(x * x, axis=-1, keepdims=True), _EPS * _EPS))
    o_ref[...] = (x * (scaling * inv)).astype(o_ref.dtype)


def _cosine_merge_kernel(f_ref, wn_ref, g_ref, raw_ref, logits_ref, *,
                         scaling, gamma, approx_recip):
    """Hot path: feature normalization, pairwise matmul, proxy-softmax merge."""
    # rsqrt (EUP) + multiply instead of sqrt/max/divide.
    f = f_ref[...].astype(jnp.float32)                                   # (Bt, Dp)
    inv = lax.rsqrt(jnp.maximum(jnp.sum(f * f, axis=-1, keepdims=True), _EPS * _EPS))
    fn = f * (scaling * inv)

    wn = wn_ref[...]                                                     # (Kp, Dp)
    dots = lax.dot_general(fn.astype(wn.dtype), wn, (((1,), (1,)), ((), ())),
                           preferred_element_type=jnp.float32)           # (Bt, Kp)

    # ||fn||^2 == ||wn||^2 == scaling^2 (rows are unit up to the eps clamp), so the
    # stable cosine distance collapses to a fused scale+clamp over (Bt, Kp).
    raw = -jnp.maximum(2.0 * scaling * scaling - 2.0 * dots, 0.0)
    raw_ref[...] = raw.astype(raw_ref.dtype)

    # Softmax-merge the proxies of each class: two matmuls against the (Kp, Cp)
    # group-membership matrix + one tiny (Bt, Cp) reciprocal. The per-row max
    # cancels exactly in num/den but prevents exp underflow for large gamma.
    m = jnp.max(raw, axis=-1, keepdims=True)
    e = jnp.exp(gamma * (raw - m))
    g = g_ref[...]                                                       # (Kp, Cp)
    num = jnp.dot(raw * e, g, preferred_element_type=jnp.float32)        # (Bt, Cp)
    den = jnp.maximum(jnp.dot(e, g, preferred_element_type=jnp.float32), 1e-30)
    if approx_recip:
        logits = num * pl.reciprocal(den, approx=True)
    else:
        logits = num / den
    logits_ref[...] = logits.astype(logits_ref.dtype)


@functools.partial(jax.jit, static_argnames=(
    "proxy_per_class", "n_classes", "scaling", "gamma", "matmul_dtype", "batch_tile"))
def cosine_classifier_forward(features, weights, *, proxy_per_class, n_classes,
                              scaling=1.0, gamma=1.0, matmul_dtype=jnp.float32,
                              batch_tile=128):
    B, D = features.shape
    K = weights.shape[0]
    assert K == proxy_per_class * n_classes
    C = n_classes

    # Lane-dense padding (last dims -> multiples of 128), sublane-aligned batch tile.
    D_pad = _round_up(D, 128)
    K_pad = _round_up(K, 128)
    C_pad = _round_up(C, 128)
    Bt = min(int(batch_tile), _round_up(B, 8))
    B_pad = _round_up(B, Bt)

    f_p = jnp.zeros((B_pad, D_pad), jnp.float32).at[:B, :D].set(
        features.astype(jnp.float32))
    w_p = jnp.zeros((K_pad, D_pad), jnp.float32).at[:K, :D].set(
        weights.astype(jnp.float32))

    # Proxy -> class membership matrix (padded proxies / classes map to nothing),
    # built once here instead of per grid step inside the kernel.
    k_idx = jnp.arange(K_pad)[:, None]
    c_idx = jnp.arange(C_pad)[None, :]
    g = ((k_idx // proxy_per_class == c_idx) & (k_idx < K) & (c_idx < C)
         ).astype(jnp.float32)

    item = jnp.dtype(matmul_dtype).itemsize
    approx_recip = item < 4  # reduced-precision (bf16) path uses the EUP reciprocal

    # --- prologue: normalize + scale + cast the weights once -----------------
    Kt = math.gcd(K_pad, 512)
    wn = pl.pallas_call(
        functools.partial(_normalize_rows_kernel, scaling=float(scaling)),
        out_shape=jax.ShapeDtypeStruct((K_pad, D_pad), matmul_dtype),
        grid_spec=pltpu.PrefetchScalarGridSpec(
            num_scalar_prefetch=0,
            grid=(K_pad // Kt,),
            in_specs=[pl.BlockSpec((Kt, D_pad), lambda i: (i, 0))],
            out_specs=pl.BlockSpec((Kt, D_pad), lambda i: (i, 0)),
        ),
        compiler_params=pltpu.CompilerParams(
            dimension_semantics=("parallel",),
            vmem_limit_bytes=_vmem_budget(2 * Kt * D_pad * (4 + item))),
    )(w_p)

    # --- main kernel: gridded over batch tiles; wn and g stay VMEM-resident --
    per_step_bytes = 2 * (Bt * D_pad * 4            # feature tile (double-buffered)
                          + K_pad * D_pad * item    # resident normalized weights
                          + K_pad * C_pad * 4       # resident group matrix
                          + Bt * K_pad * 4          # raw tile
                          + Bt * C_pad * 4)         # logits tile
    raw_p, logits_p = pl.pallas_call(
        functools.partial(_cosine_merge_kernel, scaling=float(scaling),
                          gamma=float(gamma), approx_recip=approx_recip),
        out_shape=(jax.ShapeDtypeStruct((B_pad, K_pad), jnp.float32),
                   jax.ShapeDtypeStruct((B_pad, C_pad), jnp.float32)),
        grid_spec=pltpu.PrefetchScalarGridSpec(
            num_scalar_prefetch=0,
            grid=(B_pad // Bt,),
            in_specs=[pl.BlockSpec((Bt, D_pad), lambda i: (i, 0)),
                      pl.BlockSpec((K_pad, D_pad), lambda i: (0, 0)),
                      pl.BlockSpec((K_pad, C_pad), lambda i: (0, 0))],
            out_specs=[pl.BlockSpec((Bt, K_pad), lambda i: (i, 0)),
                       pl.BlockSpec((Bt, C_pad), lambda i: (i, 0))],
        ),
        compiler_params=pltpu.CompilerParams(
            dimension_semantics=("parallel",),   # v7x: shard batch tiles across 2 TCs
            vmem_limit_bytes=_vmem_budget(per_step_bytes)),
    )(f_p, wn, g)

    return {"logits": logits_p[:B, :C], "raw_logits": raw_p[:B, :K]}


def _reference_forward(features, weights, *, proxy_per_class, n_classes,
                       scaling=1.0, gamma=1.0):
    """Pure-JAX reference mirroring the PyTorch code path."""
    eps = 1e-12
    fn = scaling * features / jnp.maximum(
        jnp.linalg.norm(features, axis=-1, keepdims=True), eps)
    wn = scaling * weights / jnp.maximum(
        jnp.linalg.norm(weights, axis=-1, keepdims=True), eps)
    d2 = (jnp.sum(fn * fn, -1, keepdims=True) + jnp.sum(wn * wn, -1)[None, :]
          - 2.0 * fn @ wn.T)
    d2 = jnp.maximum(d2, 0.0)
    raw = -d2
    B = features.shape[0]
    spc = raw.reshape(B, n_classes, proxy_per_class)
    attn = jax.nn.softmax(gamma * spc, axis=-1)
    logits = jnp.sum(spc * attn, axis=-1)
    return {"logits": logits, "raw_logits": raw}


if __name__ == "__main__":
    # Small shapes consistent with the module: features_dim=32, 4 classes,
    # 10 proxies per class (module default), batch=2.
    B, D = 2, 32
    n_classes, P = 4, 10
    K = n_classes * P

    key = jax.random.PRNGKey(0)
    kf, kw = jax.random.split(key)
    features = jax.random.normal(kf, (B, D), dtype=jnp.float32)
    # add_classes(): kaiming_normal_(nonlinearity='linear') -> std = 1/sqrt(fan_in=D)
    weights = jax.random.normal(kw, (K, D), dtype=jnp.float32) / math.sqrt(D)

    ref = _reference_forward(features, weights, proxy_per_class=P,
                             n_classes=n_classes, scaling=1.0, gamma=1.0)

    # f32 MXU path: tight check against the PyTorch-mirroring reference.
    out = cosine_classifier_forward(features, weights, proxy_per_class=P,
                                    n_classes=n_classes, scaling=1.0, gamma=1.0,
                                    matmul_dtype=jnp.float32)
    jax.block_until_ready(out)
    assert out["raw_logits"].shape == (B, K)
    assert out["logits"].shape == (B, n_classes)
    assert jnp.allclose(out["raw_logits"], ref["raw_logits"], atol=1e-4, rtol=1e-4)
    assert jnp.allclose(out["logits"], ref["logits"], atol=1e-4, rtol=1e-4)

    # bf16 MXU path (perf configuration for v5e/v6e/v7x): loose smoke check.
    out_bf16 = cosine_classifier_forward(features, weights, proxy_per_class=P,
                                         n_classes=n_classes, scaling=1.0, gamma=1.0,
                                         matmul_dtype=jnp.bfloat16)
    jax.block_until_ready(out_bf16)
    assert jnp.allclose(out_bf16["raw_logits"], ref["raw_logits"], atol=1e-1, rtol=1e-1)
    assert jnp.allclose(out_bf16["logits"], ref["logits"], atol=1e-1, rtol=1e-1)

    print("KERNEL_OK")
</pallas_src>

<mosaic_0001>
module attributes {stable_mosaic.version = 11 : i64} {
  func.func @_normalize_rows_kernel(%arg0: i32, %arg1: memref<128x128xf32, #tpu.memory_space<vmem>>, %arg2: memref<128x128xf32, #tpu.memory_space<vmem>>) attributes {dimension_semantics = [#tpu.dimension_semantics<parallel>], iteration_bounds = array<i64: 1>, scalar_prefetch = 0 : i64, scratch_operands = 0 : i64, tpu.core_type = #tpu.core_type<tc>, window_params = [{transform_indices = @transform_0, window_bounds = array<i64: 128, 128>}, {transform_indices = @transform_1, window_bounds = array<i64: 128, 128>}]} {
    %c0 = arith.constant 0 : index
    %c0_0 = arith.constant 0 : index
    %0 = vector.load %arg1[%c0, %c0_0] : memref<128x128xf32, #tpu.memory_space<vmem>>, vector<128x128xf32>
    %1 = arith.mulf %0, %0 : vector<128x128xf32>
    %cst = arith.constant dense<0.000000e+00> : vector<128xf32>
    %2 = vector.multi_reduction <add>, %1, %cst [1] : vector<128x128xf32> to vector<128xf32>
    %3 = vector.shape_cast %2 : vector<128xf32> to vector<128x1xf32>
    %cst_1 = arith.constant 1.000000e-24 : f32
    %4 = vector.broadcast %cst_1 : f32 to vector<128x1xf32>
    %5 = arith.maximumf %3, %4 : vector<128x1xf32>
    %6 = math.rsqrt %5 : vector<128x1xf32>
    %cst_2 = arith.constant 1.000000e+00 : f32
    %7 = vector.broadcast %cst_2 : f32 to vector<128x1xf32>
    %8 = arith.mulf %7, %6 : vector<128x1xf32>
    %9 = vector.broadcast %8 : vector<128x1xf32> to vector<128x128xf32>
    %10 = arith.mulf %0, %9 : vector<128x128xf32>
    %c0_3 = arith.constant 0 : index
    %c0_4 = arith.constant 0 : index
    %11 = vector.load %arg2[%c0_3, %c0_4] : memref<128x128xf32, #tpu.memory_space<vmem>>, vector<128x128xf32>
    tpu.vector_store %arg2[%c0_3, %c0_4], %10 {strides = array<i32>} : memref<128x128xf32, #tpu.memory_space<vmem>>, vector<128x128xf32>,
    return
  }
  func.func @transform_0(%arg0: i32) -> (i32, i32) {
    %c0_i32 = arith.constant 0 : i32
    %c0_i32_0 = arith.constant 0 : i32
    return %arg0, %c0_i32 : i32, i32
  }
  func.func @transform_1(%arg0: i32) -> (i32, i32) {
    %c0_i32 = arith.constant 0 : i32
    %c0_i32_0 = arith.constant 0 : i32
    return %arg0, %c0_i32 : i32, i32
  }
}

module attributes {stable_mosaic.version = 11 : i64} {
  func.func @_cosine_merge_kernel(%arg0: i32, %arg1: memref<8x128xf32, #tpu.memory_space<vmem>>, %arg2: memref<128x128xf32, #tpu.memory_space<vmem>>, %arg3: memref<128x128xf32, #tpu.memory_space<vmem>>, %arg4: memref<8x128xf32, #tpu.memory_space<vmem>>, %arg5: memref<8x128xf32, #tpu.memory_space<vmem>>) attributes {dimension_semantics = [#tpu.dimension_semantics<parallel>], iteration_bounds = array<i64: 1>, scalar_prefetch = 0 : i64, scratch_operands = 0 : i64, tpu.core_type = #tpu.core_type<tc>, window_params = [{transform_indices = @transform_0, window_bounds = array<i64: 8, 128>}, {pipeline_mode = #tpu.pipeline_mode<synchronous>, transform_indices = @transform_1, window_bounds = array<i64: 128, 128>}, {pipeline_mode = #tpu.pipeline_mode<synchronous>, transform_indices = @transform_2, window_bounds = array<i64: 128, 128>}, {transform_indices = @transform_3, window_bounds = array<i64: 8, 128>}, {transform_indices = @transform_4, window_bounds = array<i64: 8, 128>}]} {
    %c0 = arith.constant 0 : index
    %c0_0 = arith.constant 0 : index
    %0 = vector.load %arg1[%c0, %c0_0] : memref<8x128xf32, #tpu.memory_space<vmem>>, vector<8x128xf32>
    %1 = arith.mulf %0, %0 : vector<8x128xf32>
    %cst = arith.constant dense<0.000000e+00> : vector<8xf32>
    %2 = vector.multi_reduction <add>, %1, %cst [1] : vector<8x128xf32> to vector<8xf32>
    %3 = vector.shape_cast %2 : vector<8xf32> to vector<8x1xf32>
    %cst_1 = arith.constant 1.000000e-24 : f32
    %4 = vector.broadcast %cst_1 : f32 to vector<8x1xf32>
    %5 = arith.maximumf %3, %4 : vector<8x1xf32>
    %6 = math.rsqrt %5 : vector<8x1xf32>
    %cst_2 = arith.constant 1.000000e+00 : f32
    %7 = vector.broadcast %cst_2 : f32 to vector<8x1xf32>
    %8 = arith.mulf %7, %6 : vector<8x1xf32>
    %9 = vector.broadcast %8 : vector<8x1xf32> to vector<8x128xf32>
    %10 = arith.mulf %0, %9 : vector<8x128xf32>
    %c0_3 = arith.constant 0 : index
    %c0_4 = arith.constant 0 : index
    %11 = vector.load %arg2[%c0_3, %c0_4] : memref<128x128xf32, #tpu.memory_space<vmem>>, vector<128x128xf32>
    %cst_5 = arith.constant dense<0.000000e+00> : vector<8x128xf32>
    %12 = tpu.matmul %10, %11, %cst_5 {dimension_numbers = #tpu.dot_dimension_numbers<[1], [1], [0], [0], [0, 0, 1, 0], [], []>} : vector<8x128xf32>, vector<128x128xf32>, vector<8x128xf32> -> vector<8x128xf32>
    %cst_6 = arith.constant 2.000000e+00 : f32
    %13 = vector.broadcast %cst_6 : f32 to vector<8x128xf32>
    %14 = arith.mulf %13, %12 : vector<8x128xf32>
    %cst_7 = arith.constant 2.000000e+00 : f32
    %15 = vector.broadcast %cst_7 : f32 to vector<8x128xf32>
    %16 = arith.subf %15, %14 : vector<8x128xf32>
    %cst_8 = arith.constant 0.000000e+00 : f32
    %17 = vector.broadcast %cst_8 : f32 to vector<8x128xf32>
    %18 = arith.maximumf %16, %17 : vector<8x128xf32>
    %cst_9 = arith.constant 0.000000e+00 : f32
    %19 = vector.broadcast %cst_9 : f32 to vector<8x128xf32>
    %20 = arith.subf %19, %18 : vector<8x128xf32>
    %c0_10 = arith.constant 0 : index
    %c0_11 = arith.constant 0 : index
    %21 = vector.load %arg4[%c0_10, %c0_11] : memref<8x128xf32, #tpu.memory_space<vmem>>, vector<8x128xf32>
    tpu.vector_store %arg4[%c0_10, %c0_11], %20 {strides = array<i32>} : memref<8x128xf32, #tpu.memory_space<vmem>>, vector<8x128xf32>,
    %cst_12 = arith.constant dense<0xFF800000> : vector<8xf32>
    %22 = vector.multi_reduction <maximumf>, %20, %cst_12 [1] : vector<8x128xf32> to vector<8xf32>
    %23 = vector.shape_cast %22 : vector<8xf32> to vector<8x1xf32>
    %24 = vector.broadcast %23 : vector<8x1xf32> to vector<8x128xf32>
    %25 = arith.subf %20, %24 : vector<8x128xf32>
    %cst_13 = arith.constant 1.000000e+00 : f32
    %26 = vector.broadcast %cst_13 : f32 to vector<8x128xf32>
    %27 = arith.mulf %26, %25 : vector<8x128xf32>
    %28 = math.exp %27 : vector<8x128xf32>
    %c0_14 = arith.constant 0 : index
    %c0_15 = arith.constant 0 : index
    %29 = vector.load %arg3[%c0_14, %c0_15] : memref<128x128xf32, #tpu.memory_space<vmem>>, vector<128x128xf32>
    %30 = arith.mulf %20, %28 : vector<8x128xf32>
    %cst_16 = arith.constant dense<0.000000e+00> : vector<8x128xf32>
    %31 = tpu.matmul %30, %29, %cst_16 {dimension_numbers = #tpu.dot_dimension_numbers<[1], [0], [0], [1], [0, 0, 1, 1], [], []>} : vector<8x128xf32>, vector<128x128xf32>, vector<8x128xf32> -> vector<8x128xf32>
    %cst_17 = arith.constant dense<0.000000e+00> : vector<8x128xf32>
    %32 = tpu.matmul %28, %29, %cst_17 {dimension_numbers = #tpu.dot_dimension_numbers<[1], [0], [0], [1], [0, 0, 1, 1], [], []>} : vector<8x128xf32>, vector<128x128xf32>, vector<8x128xf32> -> vector<8x128xf32>
    %cst_18 = arith.constant 1.000000e-30 : f32
    %33 = vector.broadcast %cst_18 : f32 to vector<8x128xf32>
    %34 = arith.maximumf %32, %33 : vector<8x128xf32>
    %35 = arith.divf %31, %34 : vector<8x128xf32>
    %c0_19 = arith.constant 0 : index
    %c0_20 = arith.constant 0 : index
    %36 = vector.load %arg5[%c0_19, %c0_20] : memref<8x128xf32, #tpu.memory_space<vmem>>, vector<8x128xf32>
    tpu.vector_store %arg5[%c0_19, %c0_20], %35 {strides = array<i32>} : memref<8x128xf32, #tpu.memory_space<vmem>>, vector<8x128xf32>,
    return
  }
  func.func @transform_0(%arg0: i32) -> (i32, i32) {
    %c0_i32 = arith.constant 0 : i32
    %c0_i32_0 = arith.constant 0 : i32
    return %arg0, %c0_i32 : i32, i32
  }
  func.func @transform_1(%arg0: i32) -> (i32, i32) {
    %c0_i32 = arith.constant 0 : i32
    %c0_i32_0 = arith.constant 0 : i32
    %c0_i32_1 = arith.constant 0 : i32
    return %c0_i32, %c0_i32_0 : i32, i32
  }
  func.func @transform_2(%arg0: i32) -> (i32, i32) {
    %c0_i32 = arith.constant 0 : i32
    %c0_i32_0 = arith.constant 0 : i32
    %c0_i32_1 = arith.constant 0 : i32
    return %c0_i32, %c0_i32_0 : i32, i32
  }
  func.func @transform_3(%arg0: i32) -> (i32, i32) {
    %c0_i32 = arith.constant 0 : i32
    %c0_i32_0 = arith.constant 0 : i32
    return %arg0, %c0_i32 : i32, i32
  }
  func.func @transform_4(%arg0: i32) -> (i32, i32) {
    %c0_i32 = arith.constant 0 : i32
    %c0_i32_0 = arith.constant 0 : i32
    return %arg0, %c0_i32 : i32, i32
  }
}

</mosaic_0001>

<llo_original>
// kernel: cosine_classifier_forward.2
$region0: #{cosine_classifier_forward.2}
  #allocation0 [shape = 'u32[]', space=smem, size = 0x4, offset = 0x4, fixed_abs, tag = 'smem constant byte address 0x4 - core index']
  #allocation1 [shape = 'u32[72,128]{1,0:T(1,128)}', space=vmem, size = 0x9000, scoped, tag = 'internal scratch']
  %s0 = inlined_call_operand.vmem [shape: f32[128,128], index: 0, kind: input, shape index: {}]
  %s1 = inlined_call_operand.vmem [shape: f32[128,128], index: 1, kind: output, shape index: {}]
  %s2 = sld [smem:[#allocation0]]
  $region14: #{cosine_classifier_forward.2} parent=0
    _
  %s4 = ssub.s32 1, %s2
  %s5 = scalar_select 0, %s4, %s2
  // Predicated region
  $region2: #{cosine_classifier_forward.2} parent=0 // pred_check
    _
  $region3: #{cosine_classifier_forward.2} parent=0 // pred_check_branch
    %7 = sbr.rel (0) target = $region5
  $region4: #{cosine_classifier_forward.2} parent=0 // pred_region
    _
  $region5: #{cosine_classifier_forward.2} parent=0 // pred_fallthru
    _
  %v8 = vld [vmem:[%s0] sm:$0xff]
  %v9 = vld [vmem:[%s0 + $0x8] sm:$0xff]
  %v10 = vld [vmem:[%s0 + $0x10] sm:$0xff]
  %v11 = vld [vmem:[%s0 + $0x18] sm:$0xff]
  %v12 = vld [vmem:[%s0 + $0x20] sm:$0xff]
  %v13 = vld [vmem:[%s0 + $0x28] sm:$0xff]
  %v14 = vld [vmem:[%s0 + $0x30] sm:$0xff]
  %v15 = vld [vmem:[%s0 + $0x38] sm:$0xff]
  %v16 = vld [vmem:[%s0 + $0x40] sm:$0xff]
  %v17 = vld [vmem:[%s0 + $0x48] sm:$0xff]
  %v18 = vld [vmem:[%s0 + $0x50] sm:$0xff]
  %v19 = vld [vmem:[%s0 + $0x58] sm:$0xff]
  %v20 = vld [vmem:[%s0 + $0x60] sm:$0xff]
  %v21 = vld [vmem:[%s0 + $0x68] sm:$0xff]
  %v22 = vld [vmem:[%s0 + $0x70] sm:$0xff]
  %v23 = vld [vmem:[%s0 + $0x78] sm:$0xff]
  %v24 = vmul.f32 %v8, %v8
  %v25 = vmul.f32 %v9, %v9
  %v26 = vmul.f32 %v10, %v10
  %v27 = vmul.f32 %v11, %v11
  %v28 = vmul.f32 %v12, %v12
  %v29 = vmul.f32 %v13, %v13
  %v30 = vmul.f32 %v14, %v14
  %v31 = vmul.f32 %v15, %v15
  %v32 = vmul.f32 %v16, %v16
  %v33 = vmul.f32 %v17, %v17
  %v34 = vmul.f32 %v18, %v18
  %v35 = vmul.f32 %v19, %v19
  %v36 = vmul.f32 %v20, %v20
  %v37 = vmul.f32 %v21, %v21
  %v38 = vmul.f32 %v22, %v22
  %v39 = vmul.f32 %v23, %v23
  %40 = vadd.xlane.f32.xlu0 %v24
  %v41 = vpop.xlane.xlu0 %40
  %42 = vadd.xlane.f32.xlu0 %v25
  %v43 = vpop.xlane.xlu0 %42
  %44 = vadd.xlane.f32.xlu0 %v26
  %v45 = vpop.xlane.xlu0 %44
  %46 = vadd.xlane.f32.xlu0 %v27
  %v47 = vpop.xlane.xlu0 %46
  %48 = vadd.xlane.f32.xlu0 %v28
  %v49 = vpop.xlane.xlu0 %48
  %50 = vadd.xlane.f32.xlu0 %v29
  %v51 = vpop.xlane.xlu0 %50
  %52 = vadd.xlane.f32.xlu0 %v30
  %v53 = vpop.xlane.xlu0 %52
  %54 = vadd.xlane.f32.xlu0 %v31
  %v55 = vpop.xlane.xlu0 %54
  %56 = vadd.xlane.f32.xlu0 %v32
  %v57 = vpop.xlane.xlu0 %56
  %58 = vadd.xlane.f32.xlu0 %v33
  %v59 = vpop.xlane.xlu0 %58
  %60 = vadd.xlane.f32.xlu0 %v34
  %v61 = vpop.xlane.xlu0 %60
  %62 = vadd.xlane.f32.xlu0 %v35
  %v63 = vpop.xlane.xlu0 %62
  %64 = vadd.xlane.f32.xlu0 %v36
  %v65 = vpop.xlane.xlu0 %64
  %66 = vadd.xlane.f32.xlu0 %v37
  %v67 = vpop.xlane.xlu0 %66
  %68 = vadd.xlane.f32.xlu0 %v38
  %v69 = vpop.xlane.xlu0 %68
  %70 = vadd.xlane.f32.xlu0 %v39
  %v71 = vpop.xlane.xlu0 %70
  %v72 = vmax.f32 %v41, 1e-24
  %v73 = vmax.f32 %v43, 1e-24
  %v74 = vmax.f32 %v45, 1e-24
  %v75 = vmax.f32 %v47, 1e-24
  %v76 = vmax.f32 %v49, 1e-24
  %v77 = vmax.f32 %v51, 1e-24
  %v78 = vmax.f32 %v53, 1e-24
  %v79 = vmax.f32 %v55, 1e-24
  %v80 = vmax.f32 %v57, 1e-24
  %v81 = vmax.f32 %v59, 1e-24
  %v82 = vmax.f32 %v61, 1e-24
  %v83 = vmax.f32 %v63, 1e-24
  %v84 = vmax.f32 %v65, 1e-24
  %v85 = vmax.f32 %v67, 1e-24
  %v86 = vmax.f32 %v69, 1e-24
  %v87 = vmax.f32 %v71, 1e-24
  %v88 = vrsqrt.pop %v72
  %v89 = vmul.f32 %v88, %v72
  %v90 = vmul.f32 %v89, %v88
  %v91 = vmul.f32 0.5, %v90
  %v92 = vsub.f32 1.5, %v91
  %v93 = vmul.f32 %v88, %v92
  %vm94 = vweird.f32 %v72
  %vm95 = vweird.f32 %v88
  %vm96 = vmor %vm94, %vm95
  %v97 = vsel %vm96, %v88, %v93
  %v98 = vrsqrt.pop %v73
  %v99 = vmul.f32 %v98, %v73
  %v100 = vmul.f32 %v99, %v98
  %v101 = vmul.f32 0.5, %v100
  %v102 = vsub.f32 1.5, %v101
  %v103 = vmul.f32 %v98, %v102
  %vm104 = vweird.f32 %v73
  %vm105 = vweird.f32 %v98
  %vm106 = vmor %vm104, %vm105
  %v107 = vsel %vm106, %v98, %v103
  %v108 = vrsqrt.pop %v74
  %v109 = vmul.f32 %v108, %v74
  %v110 = vmul.f32 %v109, %v108
  %v111 = vmul.f32 0.5, %v110
  %v112 = vsub.f32 1.5, %v111
  %v113 = vmul.f32 %v108, %v112
  %vm114 = vweird.f32 %v74
  %vm115 = vweird.f32 %v108
  %vm116 = vmor %vm114, %vm115
  %v117 = vsel %vm116, %v108, %v113
  %v118 = vrsqrt.pop %v75
  %v119 = vmul.f32 %v118, %v75
  %v120 = vmul.f32 %v119, %v118
  %v121 = vmul.f32 0.5, %v120
  %v122 = vsub.f32 1.5, %v121
  %v123 = vmul.f32 %v118, %v122
  %vm124 = vweird.f32 %v75
  %vm125 = vweird.f32 %v118
  %vm126 = vmor %vm124, %vm125
  %v127 = vsel %vm126, %v118, %v123
  %v128 = vrsqrt.pop %v76
  %v129 = vmul.f32 %v128, %v76
  %v130 = vmul.f32 %v129, %v128
  %v131 = vmul.f32 0.5, %v130
  %v132 = vsub.f32 1.5, %v131
  %v133 = vmul.f32 %v128, %v132
  %vm134 = vweird.f32 %v76
  %vm135 = vweird.f32 %v128
  %vm136 = vmor %vm134, %vm135
  %v137 = vsel %vm136, %v128, %v133
  %v138 = vrsqrt.pop %v77
  %v139 = vmul.f32 %v138, %v77
  %v140 = vmul.f32 %v139, %v138
  %v141 = vmul.f32 0.5, %v140
  %v142 = vsub.f32 1.5, %v141
  %v143 = vmul.f32 %v138, %v142
  %vm144 = vweird.f32 %v77
  %vm145 = vweird.f32 %v138
  %vm146 = vmor %vm144, %vm145
  %v147 = vsel %vm146, %v138, %v143
  %v148 = vrsqrt.pop %v78
  %v149 = vmul.f32 %v148, %v78
  %v150 = vmul.f32 %v149, %v148
  %v151 = vmul.f32 0.5, %v150
  %v152 = vsub.f32 1.5, %v151
  %v153 = vmul.f32 %v148, %v152
  %vm154 = vweird.f32 %v78
  %vm155 = vweird.f32 %v148
  %vm156 = vmor %vm154, %vm155
  %v157 = vsel %vm156, %v148, %v153
  %v158 = vrsqrt.pop %v79
  %v159 = vmul.f32 %v158, %v79
  %v160 = vmul.f32 %v159, %v158
  %v161 = vmul.f32 0.5, %v160
  %v162 = vsub.f32 1.5, %v161
  %v163 = vmul.f32 %v158, %v162
  %vm164 = vweird.f32 %v79
  %vm165 = vweird.f32 %v158
  %vm166 = vmor %vm164, %vm165
  %v167 = vsel %vm166, %v158, %v163
  %v168 = vrsqrt.pop %v80
  %v169 = vmul.f32 %v168, %v80
  %v170 = vmul.f32 %v169, %v168
  %v171 = vmul.f32 0.5, %v170
  %v172 = vsub.f32 1.5, %v171
  %v173 = vmul.f32 %v168, %v172
  %vm174 = vweird.f32 %v80
  %vm175 = vweird.f32 %v168
  %vm176 = vmor %vm174, %vm175
  %v177 = vsel %vm176, %v168, %v173
  %v178 = vrsqrt.pop %v81
  %v179 = vmul.f32 %v178, %v81
  %v180 = vmul.f32 %v179, %v178
  %v181 = vmul.f32 0.5, %v180
  %v182 = vsub.f32 1.5, %v181
  %v183 = vmul.f32 %v178, %v182
  %vm184 = vweird.f32 %v81
  %vm185 = vweird.f32 %v178
  %vm186 = vmor %vm184, %vm185
  %v187 = vsel %vm186, %v178, %v183
  %v188 = vrsqrt.pop %v82
  %v189 = vmul.f32 %v188, %v82
  %v190 = vmul.f32 %v189, %v188
  %v191 = vmul.f32 0.5, %v190
  %v192 = vsub.f32 1.5, %v191
  %v193 = vmul.f32 %v188, %v192
  %vm194 = vweird.f32 %v82
  %vm195 = vweird.f32 %v188
  %vm196 = vmor %vm194, %vm195
  %v197 = vsel %vm196, %v188, %v193
  %v198 = vrsqrt.pop %v83
  %v199 = vmul.f32 %v198, %v83
  %v200 = vmul.f32 %v199, %v198
  %v201 = vmul.f32 0.5, %v200
  %v202 = vsub.f32 1.5, %v201
  %v203 = vmul.f32 %v198, %v202
  %vm204 = vweird.f32 %v83
  %vm205 = vweird.f32 %v198
  %vm206 = vmor %vm204, %vm205
  %v207 = vsel %vm206, %v198, %v203
  %v208 = vrsqrt.pop %v84
  %v209 = vmul.f32 %v208, %v84
  %v210 = vmul.f32 %v209, %v208
  %v211 = vmul.f32 0.5, %v210
  %v212 = vsub.f32 1.5, %v211
  %v213 = vmul.f32 %v208, %v212
  %vm214 = vweird.f32 %v84
  %vm215 = vweird.f32 %v208
  %vm216 = vmor %vm214, %vm215
  %v217 = vsel %vm216, %v208, %v213
  %v218 = vrsqrt.pop %v85
  %v219 = vmul.f32 %v218, %v85
  %v220 = vmul.f32 %v219, %v218
  %v221 = vmul.f32 0.5, %v220
  %v222 = vsub.f32 1.5, %v221
  %v223 = vmul.f32 %v218, %v222
  %vm224 = vweird.f32 %v85
  %vm225 = vweird.f32 %v218
  %vm226 = vmor %vm224, %vm225
  %v227 = vsel %vm226, %v218, %v223
  %v228 = vrsqrt.pop %v86
  %v229 = vmul.f32 %v228, %v86
  %v230 = vmul.f32 %v229, %v228
  %v231 = vmul.f32 0.5, %v230
  %v232 = vsub.f32 1.5, %v231
  %v233 = vmul.f32 %v228, %v232
  %vm234 = vweird.f32 %v86
  %vm235 = vweird.f32 %v228
  %vm236 = vmor %vm234, %vm235
  %v237 = vsel %vm236, %v228, %v233
  %v238 = vrsqrt.pop %v87
  %v239 = vmul.f32 %v238, %v87
  %v240 = vmul.f32 %v239, %v238
  %v241 = vmul.f32 0.5, %v240
  %v242 = vsub.f32 1.5, %v241
  %v243 = vmul.f32 %v238, %v242
  %vm244 = vweird.f32 %v87
  %vm245 = vweird.f32 %v238
  %vm246 = vmor %vm244, %vm245
  %v247 = vsel %vm246, %v238, %v243
  %v248 = vmul.f32 %v8, %v97
  %v249 = vmul.f32 %v9, %v107
  %v250 = vmul.f32 %v10, %v117
  %v251 = vmul.f32 %v11, %v127
  %v252 = vmul.f32 %v12, %v137
  %v253 = vmul.f32 %v13, %v147
  %v254 = vmul.f32 %v14, %v157
  %v255 = vmul.f32 %v15, %v167
  %v256 = vmul.f32 %v16, %v177
  %v257 = vmul.f32 %v17, %v187
  %v258 = vmul.f32 %v18, %v197
  %v259 = vmul.f32 %v19, %v207
  %v260 = vmul.f32 %v20, %v217
  %v261 = vmul.f32 %v21, %v227
  %v262 = vmul.f32 %v22, %v237
  %v263 = vmul.f32 %v23, %v247
  %264 = vst [vmem:[%s1] sm:$0xff] %v248
  %265 = vst [vmem:[%s1 + $0x8] sm:$0xff] %v249
  %266 = vst [vmem:[%s1 + $0x10] sm:$0xff] %v250
  %267 = vst [vmem:[%s1 + $0x18] sm:$0xff] %v251
  %268 = vst [vmem:[%s1 + $0x20] sm:$0xff] %v252
  %269 = vst [vmem:[%s1 + $0x28] sm:$0xff] %v253
  %270 = vst [vmem:[%s1 + $0x30] sm:$0xff] %v254
  %271 = vst [vmem:[%s1 + $0x38] sm:$0xff] %v255
  %272 = vst [vmem:[%s1 + $0x40] sm:$0xff] %v256
  %273 = vst [vmem:[%s1 + $0x48] sm:$0xff] %v257
  %274 = vst [vmem:[%s1 + $0x50] sm:$0xff] %v258
  %275 = vst [vmem:[%s1 + $0x58] sm:$0xff] %v259
  %276 = vst [vmem:[%s1 + $0x60] sm:$0xff] %v260
  %277 = vst [vmem:[%s1 + $0x68] sm:$0xff] %v261
  %278 = vst [vmem:[%s1 + $0x70] sm:$0xff] %v262
  %279 = vst [vmem:[%s1 + $0x78] sm:$0xff] %v263
  // Predicated region
  $region6: #{cosine_classifier_forward.2} parent=0 // pred_check
    _
  $region7: #{cosine_classifier_forward.2} parent=0 // pred_check_branch
    %281 = sbr.rel (0) target = $region9
  $region8: #{cosine_classifier_forward.2} parent=0 // pred_region
    _
  $region9: #{cosine_classifier_forward.2} parent=0 // pred_fallthru
    _
  // Predicated region
  $region10: #{cosine_classifier_forward.2} parent=0 // pred_check
    _
  $region11: #{cosine_classifier_forward.2} parent=0 // pred_check_branch
    %283 = sbr.rel (0) target = $region13
  $region12: #{cosine_classifier_forward.2} parent=0 // pred_region
    _
  $region13: #{cosine_classifier_forward.2} parent=0 // pred_fallthru
    _

// kernel: cosine_classifier_forward.3
$region0: #{cosine_classifier_forward.3}
  #allocation0 [shape = 'u32[]', space=smem, size = 0x4, offset = 0x4, fixed_abs, tag = 'smem constant byte address 0x4 - core index']
  #allocation1 [shape = 'u32[72,128]{1,0:T(1,128)}', space=vmem, size = 0x9000, scoped, tag = 'internal scratch']
  %s0 = inlined_call_operand.vmem [shape: f32[8,128], index: 0, kind: input, shape index: {}]
  %s1 = inlined_call_operand.vmem [shape: f32[128,128], index: 1, kind: input, shape index: {}]
  %s2 = inlined_call_operand.vmem [shape: f32[128,128], index: 2, kind: input, shape index: {}]
  %s3 = inlined_call_operand.vmem [shape: f32[8,128], index: 3, kind: output, shape index: {0}]
  %s4 = inlined_call_operand.vmem [shape: f32[8,128], index: 4, kind: output, shape index: {1}]
  %5 = xla_tuple %s3, %s4
  %s6 = sld [smem:[#allocation0]]
  $region30: #{cosine_classifier_forward.3} parent=0
    _
  %s8 = ssub.s32 1, %s6
  %s9 = scalar_select 0, %s8, %s6
  // Predicated region
  $region2: #{cosine_classifier_forward.3} parent=0 // pred_check
    _
  $region3: #{cosine_classifier_forward.3} parent=0 // pred_check_branch
    %11 = sbr.rel (0) target = $region5
  $region4: #{cosine_classifier_forward.3} parent=0 // pred_region
    _
  $region5: #{cosine_classifier_forward.3} parent=0 // pred_fallthru
    _
  // Predicated region
  $region6: #{cosine_classifier_forward.3} parent=0 // pred_check
    _
  $region7: #{cosine_classifier_forward.3} parent=0 // pred_check_branch
    %13 = sbr.rel (0) target = $region9
  $region8: #{cosine_classifier_forward.3} parent=0 // pred_region
    _
  $region9: #{cosine_classifier_forward.3} parent=0 // pred_fallthru
    _
  // Predicated region
  $region10: #{cosine_classifier_forward.3} parent=0 // pred_check
    _
  $region11: #{cosine_classifier_forward.3} parent=0 // pred_check_branch
    %15 = sbr.rel (0) target = $region13
  $region12: #{cosine_classifier_forward.3} parent=0 // pred_region
    _
  $region13: #{cosine_classifier_forward.3} parent=0 // pred_fallthru
    _
  %v16 = vld [vmem:[%s0] sm:$0xff]
  %v17 = vmul.f32 %v16, %v16
  %18 = vadd.xlane.f32.xlu0 %v17
  %v19 = vpop.xlane.xlu0 %18
  %v20 = vmax.f32 %v19, 1e-24
  %v21 = vrsqrt.pop %v20
  %v22 = vmul.f32 %v21, %v20
  %v23 = vmul.f32 %v22, %v21
  %v24 = vmul.f32 0.5, %v23
  %v25 = vsub.f32 1.5, %v24
  %v26 = vmul.f32 %v21, %v25
  %vm27 = vweird.f32 %v20
  %vm28 = vweird.f32 %v21
  %vm29 = vmor %vm27, %vm28
  %v30 = vsel %vm29, %v21, %v26
  %v31 = vmul.f32 %v16, %v30
  %v32 = vld [vmem:[%s1] sm:$0xff]
  %v33 = vld [vmem:[%s1 + $0x8] sm:$0xff]
  %v34 = vld [vmem:[%s1 + $0x10] sm:$0xff]
  %v35 = vld [vmem:[%s1 + $0x18] sm:$0xff]
  %v36 = vld [vmem:[%s1 + $0x20] sm:$0xff]
  %v37 = vld [vmem:[%s1 + $0x28] sm:$0xff]
  %v38 = vld [vmem:[%s1 + $0x30] sm:$0xff]
  %v39 = vld [vmem:[%s1 + $0x38] sm:$0xff]
  %v40 = vld [vmem:[%s1 + $0x40] sm:$0xff]
  %v41 = vld [vmem:[%s1 + $0x48] sm:$0xff]
  %v42 = vld [vmem:[%s1 + $0x50] sm:$0xff]
  %v43 = vld [vmem:[%s1 + $0x58] sm:$0xff]
  %v44 = vld [vmem:[%s1 + $0x60] sm:$0xff]
  %v45 = vld [vmem:[%s1 + $0x68] sm:$0xff]
  %v46 = vld [vmem:[%s1 + $0x70] sm:$0xff]
  %v47 = vld [vmem:[%s1 + $0x78] sm:$0xff]
  %48 = vmatpush.xpose.msra.mxu0 %v47
  %49 = vmatpush.xpose.msra.mxu0 %v46
  %50 = vmatpush.xpose.msra.mxu0 %v45
  %51 = vmatpush.xpose.msra.mxu0 %v44
  %52 = vmatpush.xpose.msra.mxu0 %v43
  %53 = vmatpush.xpose.msra.mxu0 %v42
  %54 = vmatpush.xpose.msra.mxu0 %v41
  %55 = vmatpush.xpose.msra.mxu0 %v40
  %56 = vmatpush.xpose.msra.mxu0 %v39
  %57 = vmatpush.xpose.msra.mxu0 %v38
  %58 = vmatpush.xpose.msra.mxu0 %v37
  %59 = vmatpush.xpose.msra.mxu0 %v36
  %60 = vmatpush.xpose.msra.mxu0 %v35
  %61 = vmatpush.xpose.msra.mxu0 %v34
  %62 = vmatpush.xpose.msra.mxu0 %v33
  %63 = vmatpush.xpose.msra.mxu0 %v32
  %64 = vmatmul.f32.gmra.mxu0 %v31
  %v65 = vpop.f32.mrf.mxu0
  %v66 = vadd.f32 0.0, %v65
  %67 = vdwg.mxu0
  %v68 = vmul.f32 %v66, 2.0
  %v69 = vsub.f32 2.0, %v68
  %v70 = vmax.f32 %v69, 0.0
  %v71 = vsub.f32 0.0, %v70
  %72 = vst [vmem:[%s3] sm:$0xff] %v71
  %73 = vmax.xlane.f32.xlu0 %v71
  %v74 = vpop.xlane.xlu0 %73
  %v75 = vsub.f32 %v71, %v74
  %v76 = vmul.f32 %v75, 1.442695
  %v77 = vpow.pop %v76
  %v78 = vld [vmem:[%s2] sm:$0xff]
  %v79 = vld [vmem:[%s2 + $0x8] sm:$0xff]
  %v80 = vld [vmem:[%s2 + $0x10] sm:$0xff]
  %v81 = vld [vmem:[%s2 + $0x18] sm:$0xff]
  %v82 = vld [vmem:[%s2 + $0x20] sm:$0xff]
  %v83 = vld [vmem:[%s2 + $0x28] sm:$0xff]
  %v84 = vld [vmem:[%s2 + $0x30] sm:$0xff]
  %v85 = vld [vmem:[%s2 + $0x38] sm:$0xff]
  %v86 = vld [vmem:[%s2 + $0x40] sm:$0xff]
  %v87 = vld [vmem:[%s2 + $0x48] sm:$0xff]
  %v88 = vld [vmem:[%s2 + $0x50] sm:$0xff]
  %v89 = vld [vmem:[%s2 + $0x58] sm:$0xff]
  %v90 = vld [vmem:[%s2 + $0x60] sm:$0xff]
  %v91 = vld [vmem:[%s2 + $0x68] sm:$0xff]
  %v92 = vld [vmem:[%s2 + $0x70] sm:$0xff]
  %v93 = vld [vmem:[%s2 + $0x78] sm:$0xff]
  %v94 = vmul.f32 %v71, %v77
  %95 = vmatpush.msra.mxu0 %v93
  %96 = vmatpush.msra.mxu0 %v92
  %97 = vmatpush.msra.mxu0 %v91
  %98 = vmatpush.msra.mxu0 %v90
  %99 = vmatpush.msra.mxu0 %v89
  %100 = vmatpush.msra.mxu0 %v88
  %101 = vmatpush.msra.mxu0 %v87
  %102 = vmatpush.msra.mxu0 %v86
  %103 = vmatpush.msra.mxu0 %v85
  %104 = vmatpush.msra.mxu0 %v84
  %105 = vmatpush.msra.mxu0 %v83
  %106 = vmatpush.msra.mxu0 %v82
  %107 = vmatpush.msra.mxu0 %v81
  %108 = vmatpush.msra.mxu0 %v80
  %109 = vmatpush.msra.mxu0 %v79
  %110 = vmatpush.msra.mxu0 %v78
  %111 = vmatmul.f32.gmra.mxu0 %v94
  %v112 = vpop.f32.mrf.mxu0
  %v113 = vadd.f32 0.0, %v112
  %114 = vdwg.mxu0
  %115 = vmatpush.msra.mxu0 %v93
  %116 = vmatpush.msra.mxu0 %v92
  %117 = vmatpush.msra.mxu0 %v91
  %118 = vmatpush.msra.mxu0 %v90
  %119 = vmatpush.msra.mxu0 %v89
  %120 = vmatpush.msra.mxu0 %v88
  %121 = vmatpush.msra.mxu0 %v87
  %122 = vmatpush.msra.mxu0 %v86
  %123 = vmatpush.msra.mxu0 %v85
  %124 = vmatpush.msra.mxu0 %v84
  %125 = vmatpush.msra.mxu0 %v83
  %126 = vmatpush.msra.mxu0 %v82
  %127 = vmatpush.msra.mxu0 %v81
  %128 = vmatpush.msra.mxu0 %v80
  %129 = vmatpush.msra.mxu0 %v79
  %130 = vmatpush.msra.mxu0 %v78
  %131 = vmatmul.f32.gmra.mxu0 %v77
  %v132 = vpop.f32.mrf.mxu0
  %v133 = vadd.f32 0.0, %v132
  %134 = vdwg.mxu0
  %v135 = vmax.f32 %v133, 1e-30
  %v136 = vrcp.pop %v135
  %v137 = vmul.f32 %v135, %v136
  %v138 = vsub.f32 1.0, %v137
  %v139 = vmul.f32 %v136, %v138
  %v140 = vadd.f32 %v136, %v139
  %vm141 = vweird.f32 %v135
  %vm142 = vweird.f32 %v136
  %vm143 = vmor %vm141, %vm142
  %v144 = vsel %vm143, %v136, %v140
  %v145 = vand.u32 2147483647, %v135
  %vm146 = vcmp.eq.f32.partialorder %v145, 8.507059e+37
  %v147 = vand.u32 %v135, 2147483648
  %v148 = vor.u32 1.1754944e-38, %v147
  %v149 = vsel %vm146, %v148, %v144
  %v150 = vmul.f32 %v113, %v149
  %151 = vst [vmem:[%s4] sm:$0xff] %v150
  // Predicated region
  $region14: #{cosine_classifier_forward.3} parent=0 // pred_check
    _
  $region15: #{cosine_classifier_forward.3} parent=0 // pred_check_branch
    %153 = sbr.rel (0) target = $region17
  $region16: #{cosine_classifier_forward.3} parent=0 // pred_region
    _
  $region17: #{cosine_classifier_forward.3} parent=0 // pred_fallthru
    _
  // Predicated region
  $region18: #{cosine_classifier_forward.3} parent=0 // pred_check
    _
  $region19: #{cosine_classifier_forward.3} parent=0 // pred_check_branch
    %155 = sbr.rel (0) target = $region21
  $region20: #{cosine_classifier_forward.3} parent=0 // pred_region
    _
  $region21: #{cosine_classifier_forward.3} parent=0 // pred_fallthru
    _
  // Predicated region
  $region22: #{cosine_classifier_forward.3} parent=0 // pred_check
    _
  $region23: #{cosine_classifier_forward.3} parent=0 // pred_check_branch
    %157 = sbr.rel (0) target = $region25
  $region24: #{cosine_classifier_forward.3} parent=0 // pred_region
    _
  $region25: #{cosine_classifier_forward.3} parent=0 // pred_fallthru
    _
  // Predicated region
  $region26: #{cosine_classifier_forward.3} parent=0 // pred_check
    _
  $region27: #{cosine_classifier_forward.3} parent=0 // pred_check_branch
    %159 = sbr.rel (0) target = $region29
  $region28: #{cosine_classifier_forward.3} parent=0 // pred_region
    _
  $region29: #{cosine_classifier_forward.3} parent=0 // pred_fallthru
    _

</llo_original>
